<compile_context>
chip_gen: v6e
topology: v6e:2x2x1
jax: 0.10.0
libtpu: 0.0.40
codegen_flags: <defaults>
</compile_context>

<pallas_src>
import functools

import jax
import jax.numpy as jnp
from jax.experimental import pallas as pl
from jax.experimental.pallas import tpu as pltpu


def _affinity_loss_kernel(x_ref, labels_ref, centers_ref, out_ref, acc_ref,
                          *, hw, tile_hw, tile_d, alpha):
    # x_ref:       (B, tile_d, tile_hw)  source dtype, streamed VMEM tile
    # labels_ref:  (B, 1)                int32, resident
    # centers_ref: (C, D)                f32, resident
    # out_ref:     (1, 1)                f32, resident across the whole grid
    # acc_ref:     (B, D)                f32 scratch: running spatial sums
    d = pl.program_id(0)
    k = pl.program_id(1)
    nd = pl.num_programs(0)
    nk = pl.num_programs(1)
    B = x_ref.shape[0]
    C = centers_ref.shape[0]
    D = acc_ref.shape[1]
    block_d = tile_d != D  # static

    # --- Streamed GAP: per-tile f32 cast + partial spatial sum. ---------------
    xf = x_ref[...].astype(jnp.float32)                      # (B, tile_d, tile_hw)
    if hw % tile_hw != 0:
        # Ragged tail tile: out-of-bounds lane contents are unspecified -> mask.
        rem = hw - k * tile_hw                               # valid lanes in this tile
        lane = jax.lax.broadcasted_iota(jnp.int32, xf.shape, 2)
        xf = jnp.where(lane < rem, xf, 0.0)
    partial = jnp.sum(xf, axis=2)                            # (B, tile_d) f32

    if block_d:
        d0 = pl.multiple_of(d * tile_d, tile_d)              # tile_d is a 128-multiple

        @pl.when(k == 0)
        def _():
            acc_ref[:, pl.ds(d0, tile_d)] = partial

        @pl.when(k > 0)
        def _():
            acc_ref[:, pl.ds(d0, tile_d)] += partial
    else:
        @pl.when(k == 0)
        def _():
            acc_ref[...] = partial

        @pl.when(k > 0)
        def _():
            acc_ref[...] += partial

    # --- Epilogue: tiny (B, D) math, only on the final grid step. -------------
    @pl.when((d == nd - 1) & (k == nk - 1))
    def _():
        pooled = acc_ref[...] * (1.0 / hw)                   # (B, D) == gap(x)

        # Gather labeled centers via a one-hot matmul (replaces B-way unrolled
        # dynamic loads + concatenate).
        labels = labels_ref[...]                             # (B, 1) int32
        classes = jax.lax.broadcasted_iota(jnp.int32, (B, C), 1)
        onehot = (labels == classes).astype(jnp.float32)     # (B, C)
        c_sel = jnp.dot(onehot, centers_ref[...],
                        preferred_element_type=jnp.float32)  # (B, D)

        # Adjusted cosine similarity, row-wise (== diagonal of distmat * mask).
        x_adj = pooled - jnp.mean(pooled, axis=1, keepdims=True)
        c_adj = c_sel - jnp.mean(c_sel, axis=1, keepdims=True)
        x_nrm = jnp.sqrt(jnp.sum(x_adj * x_adj, axis=1, keepdims=True))
        c_nrm = jnp.sqrt(jnp.sum(c_adj * c_adj, axis=1, keepdims=True))
        x_n = x_adj / jnp.maximum(x_nrm, 1e-12)              # F.normalize eps
        c_n = c_adj / jnp.maximum(c_nrm, 1e-12)
        sim = jnp.sum(x_n * c_n, axis=1, keepdims=True)      # (B, 1)
        dist_sum = jnp.sum(1.0 - sim, axis=0, keepdims=True)  # (1, 1)

        # Unbiased variance of pooled features over the batch, summed over D.
        mean_b = jnp.mean(pooled, axis=0, keepdims=True)     # (1, D)
        diff = pooled - mean_b
        var_sum = jnp.sum(jnp.sum(diff * diff, axis=0, keepdims=True),
                          axis=1, keepdims=True) / (B - 1)   # (1, 1)

        intra = dist_sum / B
        inter = dist_sum / (B * (C - 1))
        out_ref[...] = alpha * intra / var_sum + (1.0 - alpha) * inter


def _choose_tiles(B, D, hw, itemsize, x_budget):
    """Pick (tile_d, tile_hw).

    tile_d is the full D or a 128-multiple divisor of D (so the accumulator
    lane slices stay aligned); tile_hw is a multiple of 128, targeting >=512
    lanes (capped at 2048), with the double-buffered x block within x_budget.
    """
    hw_ceil = -(-hw // 128) * 128
    cap_hw = min(hw_ceil, 2048)          # >~1-2K lanes gives no further roofline gain

    def best_hw(td):
        m = x_budget // (2 * B * td * itemsize)   # double-buffered input block
        return min((m // 128) * 128, cap_hw)

    d_cands = [D] + [td for td in range((D // 128) * 128, 127, -128)
                     if td != D and D % td == 0]
    target = min(512, cap_hw)
    for min_hw in (target, 128):
        for td in d_cands:
            th = best_hw(td)
            if th >= min_hw:
                return td, th
    raise ValueError(
        "AffinityLoss kernel: even the minimum x tile (128-lane, 128-channel) "
        f"does not fit the VMEM budget ({x_budget} bytes); reduce batch or feat_dim.")


def affinity_loss(x, labels, centers, *, alpha=0.1):
    """x: (B, D, H, W) NCHW, labels: (B,) int, centers: (C, D) -> scalar f32."""
    B, D, H, W = x.shape
    C, Dc = centers.shape
    assert Dc == D
    # Matches torch semantics only for B >= 2 (var ddof=1) and C >= 2 ((C-1) divisor).
    assert B >= 2 and C >= 2, "AffinityLoss requires batch >= 2 and num_class >= 2"
    hw = H * W

    # Keep the source dtype in HBM; the kernel casts per VMEM tile.  No padding
    # copy: the ragged tail HW tile is masked inside the kernel.
    x_flat = x.reshape(B, D, hw)
    itemsize = jnp.dtype(x_flat.dtype).itemsize

    # Device-derived VMEM budget (v5e/v6e: 128 MiB, v7x: 64 MiB).
    try:
        vmem_cap = int(pltpu.get_tpu_info().vmem_capacity_bytes)
    except Exception:
        vmem_cap = 64 * 1024 * 1024                     # conservative (v7x-sized)
    x_budget = (2 * vmem_cap) // 5                      # double-buffered x tile budget
    vmem_limit = (3 * vmem_cap) // 4                    # scoped-VMEM limit w/ headroom

    tile_d, tile_hw = _choose_tiles(B, D, hw, itemsize, x_budget)
    nd = D // tile_d
    nk = pl.cdiv(hw, tile_hw)

    labels2 = labels.astype(jnp.int32).reshape(B, 1)
    centers_f32 = centers.astype(jnp.float32)

    kernel = functools.partial(_affinity_loss_kernel, hw=hw, tile_hw=tile_hw,
                               tile_d=tile_d, alpha=float(alpha))

    # Advisory cost hint for XLA scheduling around this memory-bound call.
    cost = pl.CostEstimate(
        flops=B * D * hw,
        transcendentals=4 * B,
        bytes_accessed=B * D * hw * itemsize + (C * D + B) * 4 + 4,
    )

    out = pl.pallas_call(
        kernel,
        out_shape=jax.ShapeDtypeStruct((1, 1), jnp.float32),
        grid_spec=pltpu.PrefetchScalarGridSpec(
            num_scalar_prefetch=0,
            grid=(nd, nk),                              # (D blocks, HW stream)
            in_specs=[
                pl.BlockSpec((B, tile_d, tile_hw), lambda d, k: (0, d, k)),
                pl.BlockSpec((B, 1), lambda d, k: (0, 0)),
                pl.BlockSpec((C, D), lambda d, k: (0, 0)),
            ],
            out_specs=pl.BlockSpec((1, 1), lambda d, k: (0, 0)),
            scratch_shapes=[pltpu.VMEM((B, D), jnp.float32)],
        ),
        compiler_params=pltpu.CompilerParams(
            dimension_semantics=("arbitrary", "arbitrary"),  # output resident
            vmem_limit_bytes=int(vmem_limit),
        ),
        cost_estimate=cost,
    )(x_flat, labels2, centers_f32)
    return out[0, 0]


def affinity_loss_ref(x, labels, centers):
    """Pure-JAX reference matching the PyTorch module exactly."""
    B, D, H, W = x.shape
    C = centers.shape[0]
    pooled = jnp.mean(x.reshape(B, D, H * W), axis=2)
    x_adj = pooled - jnp.mean(pooled, axis=1, keepdims=True)
    c_adj = centers - jnp.mean(centers, axis=1, keepdims=True)
    x_norm = x_adj / jnp.maximum(jnp.linalg.norm(x_adj, axis=1, keepdims=True), 1e-12)
    c_norm = c_adj / jnp.maximum(jnp.linalg.norm(c_adj, axis=1, keepdims=True), 1e-12)
    distmat = 1.0 - x_norm @ c_norm.T
    mask = (labels[:, None] == jnp.arange(C)[None, :]).astype(jnp.float32)
    var = jnp.var(pooled, axis=0, ddof=1)
    dist_sum = jnp.sum(distmat * mask)
    intra = dist_sum / B
    inter = dist_sum / (B * (C - 1))
    alpha = 0.1
    return alpha * intra / jnp.sum(var) + (1.0 - alpha) * inter


if __name__ == "__main__":
    num_class = 7
    feat_dim = 32
    B, H, W = 4, 7, 7        # hw = 49: exercises the ragged-tail mask path

    key = jax.random.PRNGKey(0)
    kx, kc, kl = jax.random.split(key, 3)

    # Deterministic "parameter" init (stands in for torch.randn centers).
    centers = jax.random.normal(kc, (num_class, feat_dim), dtype=jnp.float32)
    x = jax.random.normal(kx, (B, feat_dim, H, W), dtype=jnp.float32)
    labels = jax.random.randint(kl, (B,), 0, num_class, dtype=jnp.int32)

    loss = jax.block_until_ready(affinity_loss(x, labels, centers))
    ref = jax.block_until_ready(affinity_loss_ref(x, labels, centers))

    assert jnp.allclose(loss, ref, rtol=1e-4, atol=1e-5), (loss, ref)
    print("KERNEL_OK")
</pallas_src>

<mosaic_0001>
module attributes {stable_mosaic.version = 11 : i64} {
  func.func @_affinity_loss_kernel(%arg0: i32, %arg1: i32, %arg2: memref<4x32x128xf32, #tpu.memory_space<vmem>>, %arg3: memref<4x1xi32, #tpu.memory_space<vmem>>, %arg4: memref<7x32xf32, #tpu.memory_space<vmem>>, %arg5: memref<1x1xf32, #tpu.memory_space<vmem>>, %arg6: memref<4x32xf32, #tpu.memory_space<vmem>>) attributes {dimension_semantics = [#tpu.dimension_semantics<arbitrary>, #tpu.dimension_semantics<arbitrary>], iteration_bounds = array<i64: 1, 1>, scalar_prefetch = 0 : i64, scratch_operands = 1 : i64, tpu.core_type = #tpu.core_type<tc>, window_params = [{transform_indices = @transform_0, window_bounds = array<i64: 4, 32, 128>}, {pipeline_mode = #tpu.pipeline_mode<synchronous>, transform_indices = @transform_1, window_bounds = array<i64: 4, 1>}, {pipeline_mode = #tpu.pipeline_mode<synchronous>, transform_indices = @transform_2, window_bounds = array<i64: 7, 32>}, {pipeline_mode = #tpu.pipeline_mode<synchronous>, transform_indices = @transform_3, window_bounds = array<i64: 1, 1>}]} {
    %c0 = arith.constant 0 : index
    %c0_0 = arith.constant 0 : index
    %c0_1 = arith.constant 0 : index
    %0 = vector.load %arg2[%c0, %c0_0, %c0_1] : memref<4x32x128xf32, #tpu.memory_space<vmem>>, vector<4x32x128xf32>
    %c128_i32 = arith.constant 128 : i32
    %1 = arith.muli %arg1, %c128_i32 : i32
    %c49_i32 = arith.constant 49 : i32
    %2 = arith.subi %c49_i32, %1 : i32
    %3 = tpu.iota {dimensions = array<i32: 2>} : vector<4x32x128xi32>
    %4 = vector.broadcast %2 : i32 to vector<4x32x128xi32>
    %5 = arith.cmpi slt, %3, %4 : vector<4x32x128xi32>
    %cst = arith.constant 0.000000e+00 : f32
    %6 = vector.broadcast %cst : f32 to vector<4x32x128xf32>
    %7 = arith.select %5, %0, %6 : vector<4x32x128xi1>, vector<4x32x128xf32>
    %cst_2 = arith.constant dense<0.000000e+00> : vector<4x32xf32>
    %8 = vector.multi_reduction <add>, %7, %cst_2 [2] : vector<4x32x128xf32> to vector<4x32xf32>
    %c0_i32 = arith.constant 0 : i32
    %9 = arith.cmpi eq, %arg1, %c0_i32 : i32
    %10 = arith.extui %9 : i1 to i32
    %c0_i32_3 = arith.constant 0 : i32
    %11 = arith.cmpi ne, %10, %c0_i32_3 : i32
    scf.if %11 {
      %c0_9 = arith.constant 0 : index
      %c0_10 = arith.constant 0 : index
      %20 = vector.load %arg6[%c0_9, %c0_10] : memref<4x32xf32, #tpu.memory_space<vmem>>, vector<4x32xf32>
      tpu.vector_store %arg6[%c0_9, %c0_10], %8 {strides = array<i32>} : memref<4x32xf32, #tpu.memory_space<vmem>>, vector<4x32xf32>,
    } else {
    }
    %c0_i32_4 = arith.constant 0 : i32
    %12 = arith.cmpi sgt, %arg1, %c0_i32_4 : i32
    %13 = arith.extui %12 : i1 to i32
    %c0_i32_5 = arith.constant 0 : i32
    %14 = arith.cmpi ne, %13, %c0_i32_5 : i32
    scf.if %14 {
      %c0_9 = arith.constant 0 : index
      %c0_10 = arith.constant 0 : index
      %20 = vector.load %arg6[%c0_9, %c0_10] : memref<4x32xf32, #tpu.memory_space<vmem>>, vector<4x32xf32>
      %21 = arith.addf %20, %8 : vector<4x32xf32>
      %c0_11 = arith.constant 0 : index
      %c0_12 = arith.constant 0 : index
      %22 = vector.load %arg6[%c0_11, %c0_12] : memref<4x32xf32, #tpu.memory_space<vmem>>, vector<4x32xf32>
      tpu.vector_store %arg6[%c0_11, %c0_12], %21 {strides = array<i32>} : memref<4x32xf32, #tpu.memory_space<vmem>>, vector<4x32xf32>,
    } else {
    }
    %c0_i32_6 = arith.constant 0 : i32
    %15 = arith.cmpi eq, %arg0, %c0_i32_6 : i32
    %c0_i32_7 = arith.constant 0 : i32
    %16 = arith.cmpi eq, %arg1, %c0_i32_7 : i32
    %17 = arith.andi %15, %16 : i1
    %18 = arith.extui %17 : i1 to i32
    %c0_i32_8 = arith.constant 0 : i32
    %19 = arith.cmpi ne, %18, %c0_i32_8 : i32
    scf.if %19 {
      %c0_9 = arith.constant 0 : index
      %c0_10 = arith.constant 0 : index
      %20 = vector.load %arg6[%c0_9, %c0_10] : memref<4x32xf32, #tpu.memory_space<vmem>>, vector<4x32xf32>
      %cst_11 = arith.constant 0.0204081628 : f32
      %21 = vector.broadcast %cst_11 : f32 to vector<4x32xf32>
      %22 = arith.mulf %20, %21 : vector<4x32xf32>
      %c0_12 = arith.constant 0 : index
      %c0_13 = arith.constant 0 : index
      %23 = vector.load %arg3[%c0_12, %c0_13] : memref<4x1xi32, #tpu.memory_space<vmem>>, vector<4x1xi32>
      %24 = tpu.iota {dimensions = array<i32: 1>} : vector<4x7xi32>
      %25 = vector.broadcast %23 : vector<4x1xi32> to vector<4x7xi32>
      %26 = arith.cmpi eq, %25, %24 : vector<4x7xi32>
      %27 = arith.extui %26 : vector<4x7xi1> to vector<4x7xi32>
      %28 = arith.sitofp %27 : vector<4x7xi32> to vector<4x7xf32>
      %c0_14 = arith.constant 0 : index
      %c0_15 = arith.constant 0 : index
      %29 = vector.load %arg4[%c0_14, %c0_15] : memref<7x32xf32, #tpu.memory_space<vmem>>, vector<7x32xf32>
      %cst_16 = arith.constant dense<0.000000e+00> : vector<4x32xf32>
      %30 = tpu.matmul %28, %29, %cst_16 {dimension_numbers = #tpu.dot_dimension_numbers<[1], [0], [0], [1], [0, 0, 1, 1], [], []>} : vector<4x7xf32>, vector<7x32xf32>, vector<4x32xf32> -> vector<4x32xf32>
      %cst_17 = arith.constant dense<0.000000e+00> : vector<4xf32>
      %31 = vector.multi_reduction <add>, %22, %cst_17 [1] : vector<4x32xf32> to vector<4xf32>
      %32 = vector.shape_cast %31 : vector<4xf32> to vector<4x1xf32>
      %cst_18 = arith.constant 3.200000e+01 : f32
      %33 = vector.broadcast %cst_18 : f32 to vector<4x1xf32>
      %34 = arith.divf %32, %33 : vector<4x1xf32>
      %35 = vector.broadcast %34 : vector<4x1xf32> to vector<4x32xf32>
      %36 = arith.subf %22, %35 : vector<4x32xf32>
      %cst_19 = arith.constant dense<0.000000e+00> : vector<4xf32>
      %37 = vector.multi_reduction <add>, %30, %cst_19 [1] : vector<4x32xf32> to vector<4xf32>
      %38 = vector.shape_cast %37 : vector<4xf32> to vector<4x1xf32>
      %cst_20 = arith.constant 3.200000e+01 : f32
      %39 = vector.broadcast %cst_20 : f32 to vector<4x1xf32>
      %40 = arith.divf %38, %39 : vector<4x1xf32>
      %41 = vector.broadcast %40 : vector<4x1xf32> to vector<4x32xf32>
      %42 = arith.subf %30, %41 : vector<4x32xf32>
      %43 = arith.mulf %36, %36 : vector<4x32xf32>
      %cst_21 = arith.constant dense<0.000000e+00> : vector<4xf32>
      %44 = vector.multi_reduction <add>, %43, %cst_21 [1] : vector<4x32xf32> to vector<4xf32>
      %45 = vector.shape_cast %44 : vector<4xf32> to vector<4x1xf32>
      %46 = math.sqrt %45 : vector<4x1xf32>
      %47 = arith.mulf %42, %42 : vector<4x32xf32>
      %cst_22 = arith.constant dense<0.000000e+00> : vector<4xf32>
      %48 = vector.multi_reduction <add>, %47, %cst_22 [1] : vector<4x32xf32> to vector<4xf32>
      %49 = vector.shape_cast %48 : vector<4xf32> to vector<4x1xf32>
      %50 = math.sqrt %49 : vector<4x1xf32>
      %cst_23 = arith.constant 9.99999996E-13 : f32
      %51 = vector.broadcast %cst_23 : f32 to vector<4x1xf32>
      %52 = arith.maximumf %46, %51 : vector<4x1xf32>
      %53 = vector.broadcast %52 : vector<4x1xf32> to vector<4x32xf32>
      %54 = arith.divf %36, %53 : vector<4x32xf32>
      %cst_24 = arith.constant 9.99999996E-13 : f32
      %55 = vector.broadcast %cst_24 : f32 to vector<4x1xf32>
      %56 = arith.maximumf %50, %55 : vector<4x1xf32>
      %57 = vector.broadcast %56 : vector<4x1xf32> to vector<4x32xf32>
      %58 = arith.divf %42, %57 : vector<4x32xf32>
      %59 = arith.mulf %54, %58 : vector<4x32xf32>
      %cst_25 = arith.constant dense<0.000000e+00> : vector<4xf32>
      %60 = vector.multi_reduction <add>, %59, %cst_25 [1] : vector<4x32xf32> to vector<4xf32>
      %61 = vector.shape_cast %60 : vector<4xf32> to vector<4x1xf32>
      %cst_26 = arith.constant 1.000000e+00 : f32
      %62 = vector.broadcast %cst_26 : f32 to vector<4x1xf32>
      %63 = arith.subf %62, %61 : vector<4x1xf32>
      %cst_27 = arith.constant dense<0.000000e+00> : vector<1xf32>
      %64 = vector.multi_reduction <add>, %63, %cst_27 [0] : vector<4x1xf32> to vector<1xf32>
      %65 = vector.shape_cast %64 : vector<1xf32> to vector<1x1xf32>
      %cst_28 = arith.constant dense<0.000000e+00> : vector<32xf32>
      %66 = vector.multi_reduction <add>, %22, %cst_28 [0] : vector<4x32xf32> to vector<32xf32>
      %67 = vector.shape_cast %66 : vector<32xf32> to vector<1x32xf32>
      %cst_29 = arith.constant 4.000000e+00 : f32
      %68 = vector.broadcast %cst_29 : f32 to vector<1x32xf32>
      %69 = arith.divf %67, %68 : vector<1x32xf32>
      %70 = vector.broadcast %69 : vector<1x32xf32> to vector<4x32xf32>
      %71 = arith.subf %22, %70 : vector<4x32xf32>
      %72 = arith.mulf %71, %71 : vector<4x32xf32>
      %cst_30 = arith.constant dense<0.000000e+00> : vector<32xf32>
      %73 = vector.multi_reduction <add>, %72, %cst_30 [0] : vector<4x32xf32> to vector<32xf32>
      %74 = vector.shape_cast %73 : vector<32xf32> to vector<1x32xf32>
      %cst_31 = arith.constant dense<0.000000e+00> : vector<1xf32>
      %75 = vector.multi_reduction <add>, %74, %cst_31 [1] : vector<1x32xf32> to vector<1xf32>
      %76 = vector.shape_cast %75 : vector<1xf32> to vector<1x1xf32>
      %cst_32 = arith.constant 3.000000e+00 : f32
      %77 = vector.broadcast %cst_32 : f32 to vector<1x1xf32>
      %78 = arith.divf %76, %77 : vector<1x1xf32>
      %cst_33 = arith.constant 4.000000e+00 : f32
      %79 = vector.broadcast %cst_33 : f32 to vector<1x1xf32>
      %80 = arith.divf %65, %79 : vector<1x1xf32>
      %cst_34 = arith.constant 2.400000e+01 : f32
      %81 = vector.broadcast %cst_34 : f32 to vector<1x1xf32>
      %82 = arith.divf %65, %81 : vector<1x1xf32>
      %cst_35 = arith.constant 1.000000e-01 : f32
      %83 = vector.broadcast %cst_35 : f32 to vector<1x1xf32>
      %84 = arith.mulf %83, %80 : vector<1x1xf32>
      %85 = arith.divf %84, %78 : vector<1x1xf32>
      %cst_36 = arith.constant 0.899999976 : f32
      %86 = vector.broadcast %cst_36 : f32 to vector<1x1xf32>
      %87 = arith.mulf %86, %82 : vector<1x1xf32>
      %88 = arith.addf %85, %87 : vector<1x1xf32>
      %c0_37 = arith.constant 0 : index
      %c0_38 = arith.constant 0 : index
      %89 = vector.load %arg5[%c0_37, %c0_38] : memref<1x1xf32, #tpu.memory_space<vmem>>, vector<1x1xf32>
      tpu.vector_store %arg5[%c0_37, %c0_38], %88 {strides = array<i32>} : memref<1x1xf32, #tpu.memory_space<vmem>>, vector<1x1xf32>,
    } else {
    }
    return
  }
  func.func @transform_0(%arg0: i32, %arg1: i32) -> (i32, i32, i32) {
    %c0_i32 = arith.constant 0 : i32
    %c0_i32_0 = arith.constant 0 : i32
    return %c0_i32, %arg0, %arg1 : i32, i32, i32
  }
  func.func @transform_1(%arg0: i32, %arg1: i32) -> (i32, i32) {
    %c0_i32 = arith.constant 0 : i32
    %c0_i32_0 = arith.constant 0 : i32
    %c0_i32_1 = arith.constant 0 : i32
    return %c0_i32, %c0_i32_0 : i32, i32
  }
  func.func @transform_2(%arg0: i32, %arg1: i32) -> (i32, i32) {
    %c0_i32 = arith.constant 0 : i32
    %c0_i32_0 = arith.constant 0 : i32
    %c0_i32_1 = arith.constant 0 : i32
    return %c0_i32, %c0_i32_0 : i32, i32
  }
  func.func @transform_3(%arg0: i32, %arg1: i32) -> (i32, i32) {
    %c0_i32 = arith.constant 0 : i32
    %c0_i32_0 = arith.constant 0 : i32
    %c0_i32_1 = arith.constant 0 : i32
    return %c0_i32, %c0_i32_0 : i32, i32
  }
}

</mosaic_0001>

<llo_original>
// kernel: tpu_custom_call.1
$region0: #{tpu_custom_call.1}
  #allocation0 [shape = 'u32[]', space=smem, size = 0x4, offset = 0x4, fixed_abs, tag = 'smem constant byte address 0x4 - core index']
  #allocation1 [shape = 'u32[144,128]{1,0:T(1,128)}', space=vmem, size = 0x12000, scoped, tag = 'internal scratch']
  #allocation2 [shape = 'f32[4,32]{1,0:T(4,128)}', space=vmem, size = 0x800, scoped, tag = 'scratch operand']
  %s0 = inlined_call_operand.hbm [shape: f32[4,32,49], index: 0, kind: input, shape index: {}]
  %s1 = inlined_call_operand.vmem [shape: s32[4,1], index: 1, kind: input, shape index: {}]
  %s2 = inlined_call_operand.vmem [shape: f32[7,32], index: 2, kind: input, shape index: {}]
  %s3 = inlined_call_operand.hbm [shape: f32[1,1], index: 3, kind: output, shape index: {}]
  %s4 = sld [smem:[#allocation0]]
  $region38: #{tpu_custom_call.1} parent=0
    _
  %s6 = ssub.s32 1, %s4
  %s7 = scalar_select 0, %s6, %s4
  $region1: #{tpu_custom_call.1} parent=0
    #allocation3 [shape = 'u8[65536]{0}', space=vmem, size = 0x10000, scoped, tag = 'input window, operand 0, single buffered']
    #allocation4 [shape = 's32[1]{0}', space=sflag, size = 0x4, scoped, tag = 'scoped memory for tpu_custom_call.1']
    #allocation5 [shape = 's32[1]{0}', space=sflag, size = 0x4, scoped, tag = 'scoped memory for tpu_custom_call.1']
    #allocation6 [shape = 'u8[512]{0}', space=vmem, size = 0x400, scoped, tag = 'output window, operand 0, single buffered']
    %8 = vsyncpa [#allocation4], 0
    %9 = vsyncpa [#allocation5], 0
    // Predicated region
    $region2: #{tpu_custom_call.1} parent=1 // pred_check
      _
    $region3: #{tpu_custom_call.1} parent=1 // pred_check_branch
      %11 = sbr.rel (0) target = $region5
    $region4: #{tpu_custom_call.1} parent=1 // pred_region
      %s13 = ssub.s32 2048, 2048
      %14 = vsyncadd [#allocation4], %s13
      %s15 = sshll.u32 [#allocation3], 4
      %s16 = int_to_ptr.vmem [resolvable:$true] %s15
      %21 = dma.hbm_to_vmem [thread:$0]  %s0, 2048, %s16, [#allocation4], 128, 128, 8
    $region5: #{tpu_custom_call.1} parent=1 // pred_fallthru
      _
    // Predicated region
    $region6: #{tpu_custom_call.1} parent=1 // pred_check
      _
    $region7: #{tpu_custom_call.1} parent=1 // pred_check_branch
      %23 = sbr.rel (0) target = $region9
    $region8: #{tpu_custom_call.1} parent=1 // pred_region
      _
    $region9: #{tpu_custom_call.1} parent=1 // pred_fallthru
      _
    // Predicated region
    $region10: #{tpu_custom_call.1} parent=1 // pred_check
      _
    $region11: #{tpu_custom_call.1} parent=1 // pred_check_branch
      %25 = sbr.rel (0) target = $region13
    $region12: #{tpu_custom_call.1} parent=1 // pred_region
      _
    $region13: #{tpu_custom_call.1} parent=1 // pred_fallthru
      _
    // Predicated region
    $region14: #{tpu_custom_call.1} parent=1 // pred_check
      _
    $region15: #{tpu_custom_call.1} parent=1 // pred_check_branch
      %27 = sbr.rel (0) target = $region17
    $region16: #{tpu_custom_call.1} parent=1 // pred_region
      %28 = dma.done [#allocation4], 2048
    $region17: #{tpu_custom_call.1} parent=1 // pred_fallthru
      _
    %v29 = vld [vmem:[#allocation3] sm:$0xff]
    %v30 = vld [vmem:[#allocation3 + $0x8] sm:$0xff]
    %v31 = vld [vmem:[#allocation3 + $0x10] sm:$0xff]
    %v32 = vld [vmem:[#allocation3 + $0x18] sm:$0xff]
    %v33 = vld [vmem:[#allocation3 + $0x20] sm:$0xff]
    %v34 = vld [vmem:[#allocation3 + $0x28] sm:$0xff]
    %v35 = vld [vmem:[#allocation3 + $0x30] sm:$0xff]
    %v36 = vld [vmem:[#allocation3 + $0x38] sm:$0xff]
    %v37 = vld [vmem:[#allocation3 + $0x40] sm:$0xff]
    %v38 = vld [vmem:[#allocation3 + $0x48] sm:$0xff]
    %v39 = vld [vmem:[#allocation3 + $0x50] sm:$0xff]
    %v40 = vld [vmem:[#allocation3 + $0x58] sm:$0xff]
    %v41 = vld [vmem:[#allocation3 + $0x60] sm:$0xff]
    %v42 = vld [vmem:[#allocation3 + $0x68] sm:$0xff]
    %v43 = vld [vmem:[#allocation3 + $0x70] sm:$0xff]
    %v44 = vld [vmem:[#allocation3 + $0x78] sm:$0xff]
    %s45 = smul.u32 0, 128
    %s46 = ssub.s32 49, %s45
    %v47 = vlaneseq
    %v48 = vand.u32 %v47, 127
    %v49 = vstv %s46
    %vm50 = vcmp.lt.s32.totalorder %v48, %v49
    %v51 = vsel %vm50, %v29, 0.0
    %v52 = vsel %vm50, %v30, 0.0
    %v53 = vsel %vm50, %v31, 0.0
    %v54 = vsel %vm50, %v32, 0.0
    %v55 = vsel %vm50, %v33, 0.0
    %v56 = vsel %vm50, %v34, 0.0
    %v57 = vsel %vm50, %v35, 0.0
    %v58 = vsel %vm50, %v36, 0.0
    %v59 = vsel %vm50, %v37, 0.0
    %v60 = vsel %vm50, %v38, 0.0
    %v61 = vsel %vm50, %v39, 0.0
    %v62 = vsel %vm50, %v40, 0.0
    %v63 = vsel %vm50, %v41, 0.0
    %v64 = vsel %vm50, %v42, 0.0
    %v65 = vsel %vm50, %v43, 0.0
    %v66 = vsel %vm50, %v44, 0.0
    %67 = vadd.xlane.f32.xlu0 %v51
    %v68 = vpop.xlane.xlu0 %67
    %69 = vadd.xlane.f32.xlu0 %v52
    %v70 = vpop.xlane.xlu0 %69
    %71 = vadd.xlane.f32.xlu0 %v53
    %v72 = vpop.xlane.xlu0 %71
    %73 = vadd.xlane.f32.xlu0 %v54
    %v74 = vpop.xlane.xlu0 %73
    %75 = vadd.xlane.f32.xlu0 %v55
    %v76 = vpop.xlane.xlu0 %75
    %77 = vadd.xlane.f32.xlu0 %v56
    %v78 = vpop.xlane.xlu0 %77
    %79 = vadd.xlane.f32.xlu0 %v57
    %v80 = vpop.xlane.xlu0 %79
    %81 = vadd.xlane.f32.xlu0 %v58
    %v82 = vpop.xlane.xlu0 %81
    %83 = vadd.xlane.f32.xlu0 %v59
    %v84 = vpop.xlane.xlu0 %83
    %85 = vadd.xlane.f32.xlu0 %v60
    %v86 = vpop.xlane.xlu0 %85
    %87 = vadd.xlane.f32.xlu0 %v61
    %v88 = vpop.xlane.xlu0 %87
    %89 = vadd.xlane.f32.xlu0 %v62
    %v90 = vpop.xlane.xlu0 %89
    %91 = vadd.xlane.f32.xlu0 %v63
    %v92 = vpop.xlane.xlu0 %91
    %93 = vadd.xlane.f32.xlu0 %v64
    %v94 = vpop.xlane.xlu0 %93
    %95 = vadd.xlane.f32.xlu0 %v65
    %v96 = vpop.xlane.xlu0 %95
    %97 = vadd.xlane.f32.xlu0 %v66
    %v98 = vpop.xlane.xlu0 %97
    %p99 = scmp.eq.s32.totalorder 0, 0
    // Predicated region
    $region18: #{tpu_custom_call.1} parent=1 // pred_check
      %p100 = pneg %p99
    $region19: #{tpu_custom_call.1} parent=1 // pred_check_branch
      %102 = sbr.rel (%p100) target = $region21
    $region20: #{tpu_custom_call.1} parent=1 // pred_region
      %v119 = vlaneseq
      %v120 = vshrl.u32 %v119, 7
      %v121 = vsub.s32 %v48, %v120
      %v122 = vrot.slane %v68, %v121
      %v123 = vadd.s32 %v48, 4294967288
      %v124 = vlaneseq
      %v125 = vshrl.u32 %v124, 7
      %v126 = vsub.s32 %v123, %v125
      %v127 = vrot.slane %v70, %v126
      %vm128 = vcmask 130112
      %v129 = vsel %vm128, %v127, %v122
      %v130 = vadd.s32 %v48, 4294967280
      %v131 = vlaneseq
      %v132 = vshrl.u32 %v131, 7
      %v133 = vsub.s32 %v130, %v132
      %v134 = vrot.slane %v72, %v133
      %vm135 = vcmask 195712
      %v136 = vsel %vm135, %v134, %v129
      %v137 = vadd.s32 %v48, 4294967272
      %v138 = vlaneseq
      %v139 = vshrl.u32 %v138, 7
      %v140 = vsub.s32 %v137, %v139
      %v141 = vrot.slane %v74, %v140
      %vm142 = vcmask 261312
      %v143 = vsel %vm142, %v141, %v136
      %v144 = vlaneseq
      %v145 = vshrl.u32 %v144, 7
      %v146 = vsub.s32 %v48, %v145
      %v147 = vrot.slane %v76, %v146
      %v148 = vlaneseq
      %v149 = vshrl.u32 %v148, 7
      %v150 = vsub.s32 %v123, %v149
      %v151 = vrot.slane %v78, %v150
      %v152 = vsel %vm128, %v151, %v147
      %v153 = vlaneseq
      %v154 = vshrl.u32 %v153, 7
      %v155 = vsub.s32 %v130, %v154
      %v156 = vrot.slane %v80, %v155
      %v157 = vsel %vm135, %v156, %v152
      %v158 = vlaneseq
      %v159 = vshrl.u32 %v158, 7
      %v160 = vsub.s32 %v137, %v159
      %v161 = vrot.slane %v82, %v160
      %v162 = vsel %vm142, %v161, %v157
      %v163 = vlaneseq
      %v164 = vshrl.u32 %v163, 7
      %v165 = vsub.s32 %v48, %v164
      %v166 = vrot.slane %v84, %v165
      %v167 = vlaneseq
      %v168 = vshrl.u32 %v167, 7
      %v169 = vsub.s32 %v123, %v168
      %v170 = vrot.slane %v86, %v169
      %v171 = vsel %vm128, %v170, %v166
      %v172 = vlaneseq
      %v173 = vshrl.u32 %v172, 7
      %v174 = vsub.s32 %v130, %v173
      %v175 = vrot.slane %v88, %v174
      %v176 = vsel %vm135, %v175, %v171
      %v177 = vlaneseq
      %v178 = vshrl.u32 %v177, 7
      %v179 = vsub.s32 %v137, %v178
      %v180 = vrot.slane %v90, %v179
      %v181 = vsel %vm142, %v180, %v176
      %v182 = vlaneseq
      %v183 = vshrl.u32 %v182, 7
      %v184 = vsub.s32 %v48, %v183
      %v185 = vrot.slane %v92, %v184
      %v186 = vlaneseq
      %v187 = vshrl.u32 %v186, 7
      %v188 = vsub.s32 %v123, %v187
      %v189 = vrot.slane %v94, %v188
      %v190 = vsel %vm128, %v189, %v185
      %v191 = vlaneseq
      %v192 = vshrl.u32 %v191, 7
      %v193 = vsub.s32 %v130, %v192
      %v194 = vrot.slane %v96, %v193
      %v195 = vsel %vm135, %v194, %v190
      %v196 = vlaneseq
      %v197 = vshrl.u32 %v196, 7
      %v198 = vsub.s32 %v137, %v197
      %v199 = vrot.slane %v98, %v198
      %v200 = vsel %vm142, %v199, %v195
      %vm201 = vcmask 1041409
      %v202 = vsel %vm201, %v162, %v143
      %vm203 = vcmask 1042434
      %v204 = vsel %vm203, %v181, %v202
      %vm205 = vcmask 1043459
      %v206 = vsel %vm205, %v200, %v204
      %vm208 = vcmask 257024
      %209 = vst.msk [vmem:[#allocation2] sm:$0xf] %vm208, %v206
    $region21: #{tpu_custom_call.1} parent=1 // pred_fallthru
      _
    %p210 = scmp.gt.s32.totalorder 0, 0
    // Predicated region
    $region22: #{tpu_custom_call.1} parent=1 // pred_check
      %p211 = pneg %p210
    $region23: #{tpu_custom_call.1} parent=1 // pred_check_branch
      %213 = sbr.rel (%p211) target = $region25
    $region24: #{tpu_custom_call.1} parent=1 // pred_region
      %v214 = vld [vmem:[#allocation2] sm:$0xf]
      %v231 = vlaneseq
      %v232 = vshrl.u32 %v231, 7
      %v233 = vsub.s32 %v48, %v232
      %v234 = vrot.slane %v68, %v233
      %v235 = vadd.s32 %v48, 4294967288
      %v236 = vlaneseq
      %v237 = vshrl.u32 %v236, 7
      %v238 = vsub.s32 %v235, %v237
      %v239 = vrot.slane %v70, %v238
      %vm240 = vcmask 130112
      %v241 = vsel %vm240, %v239, %v234
      %v242 = vadd.s32 %v48, 4294967280
      %v243 = vlaneseq
      %v244 = vshrl.u32 %v243, 7
      %v245 = vsub.s32 %v242, %v244
      %v246 = vrot.slane %v72, %v245
      %vm247 = vcmask 195712
      %v248 = vsel %vm247, %v246, %v241
      %v249 = vadd.s32 %v48, 4294967272
      %v250 = vlaneseq
      %v251 = vshrl.u32 %v250, 7
      %v252 = vsub.s32 %v249, %v251
      %v253 = vrot.slane %v74, %v252
      %vm254 = vcmask 261312
      %v255 = vsel %vm254, %v253, %v248
      %v256 = vlaneseq
      %v257 = vshrl.u32 %v256, 7
      %v258 = vsub.s32 %v48, %v257
      %v259 = vrot.slane %v76, %v258
      %v260 = vlaneseq
      %v261 = vshrl.u32 %v260, 7
      %v262 = vsub.s32 %v235, %v261
      %v263 = vrot.slane %v78, %v262
      %v264 = vsel %vm240, %v263, %v259
      %v265 = vlaneseq
      %v266 = vshrl.u32 %v265, 7
      %v267 = vsub.s32 %v242, %v266
      %v268 = vrot.slane %v80, %v267
      %v269 = vsel %vm247, %v268, %v264
      %v270 = vlaneseq
      %v271 = vshrl.u32 %v270, 7
      %v272 = vsub.s32 %v249, %v271
      %v273 = vrot.slane %v82, %v272
      %v274 = vsel %vm254, %v273, %v269
      %v275 = vlaneseq
      %v276 = vshrl.u32 %v275, 7
      %v277 = vsub.s32 %v48, %v276
      %v278 = vrot.slane %v84, %v277
      %v279 = vlaneseq
      %v280 = vshrl.u32 %v279, 7
      %v281 = vsub.s32 %v235, %v280
      %v282 = vrot.slane %v86, %v281
      %v283 = vsel %vm240, %v282, %v278
      %v284 = vlaneseq
      %v285 = vshrl.u32 %v284, 7
      %v286 = vsub.s32 %v242, %v285
      %v287 = vrot.slane %v88, %v286
      %v288 = vsel %vm247, %v287, %v283
      %v289 = vlaneseq
      %v290 = vshrl.u32 %v289, 7
      %v291 = vsub.s32 %v249, %v290
      %v292 = vrot.slane %v90, %v291
      %v293 = vsel %vm254, %v292, %v288
      %v294 = vlaneseq
      %v295 = vshrl.u32 %v294, 7
      %v296 = vsub.s32 %v48, %v295
      %v297 = vrot.slane %v92, %v296
      %v298 = vlaneseq
      %v299 = vshrl.u32 %v298, 7
      %v300 = vsub.s32 %v235, %v299
      %v301 = vrot.slane %v94, %v300
      %v302 = vsel %vm240, %v301, %v297
      %v303 = vlaneseq
      %v304 = vshrl.u32 %v303, 7
      %v305 = vsub.s32 %v242, %v304
      %v306 = vrot.slane %v96, %v305
      %v307 = vsel %vm247, %v306, %v302
      %v308 = vlaneseq
      %v309 = vshrl.u32 %v308, 7
      %v310 = vsub.s32 %v249, %v309
      %v311 = vrot.slane %v98, %v310
      %v312 = vsel %vm254, %v311, %v307
      %vm313 = vcmask 1041409
      %v314 = vsel %vm313, %v274, %v255
      %vm315 = vcmask 1042434
      %v316 = vsel %vm315, %v293, %v314
      %vm317 = vcmask 1043459
      %v318 = vsel %vm317, %v312, %v316
      %v320 = vadd.f32 %v214, %v318
      %vm321 = vcmask 257024
      %322 = vst.msk [vmem:[#allocation2] sm:$0xf] %vm321, %v320
    $region25: #{tpu_custom_call.1} parent=1 // pred_fallthru
      _
    %p323 = scmp.eq.s32.totalorder 0, 0
    %p324 = pnand %p323, %p99
    %p325 = pneg %p324
    // Predicated region
    $region26: #{tpu_custom_call.1} parent=1 // pred_check
      _
    $region27: #{tpu_custom_call.1} parent=1 // pred_check_branch
      %327 = sbr.rel (%p324) target = $region29
    $region28: #{tpu_custom_call.1} parent=1 // pred_region
      %v328 = vld [vmem:[#allocation2] sm:$0xf]
      %v329 = vmul.f32 %v328, 0.020408163
      %v330 = vld [vmem:[%s1] sm:$0xf]
      %331 = vset.pattern.permute.xlu0 0
      %332 = vperm.xlu0 %331, %v330
      %v333 = vpop.permute.xlu0 %332
      %vm334 = vcmp.eq.s32.totalorder %v333, %v48
      %v335 = vsel %vm334, 1, 0
      %v336 = vcvt.s32.f32 %v335
      %v337 = vld [vmem:[%s2] sm:$0x7f]
      %vm338 = vcmask 56320
      %v340 = vsel %vm338, %v336, 0
      %vm342 = vcmask 1046528
      %v344 = vsel %vm342, %v337, 0
      %346 = vmatprep.subr.mxu0 0.0
      %347 = vmatpush1.msra.mxu0 0.0
      %348 = vmatprep.subr.mxu0 0.0
      %349 = vmatpush1.msra.mxu0 0.0
      %350 = vmatprep.subr.mxu0 0.0
      %351 = vmatpush1.msra.mxu0 0.0
      %352 = vmatprep.subr.mxu0 0.0
      %353 = vmatpush1.msra.mxu0 0.0
      %354 = vmatprep.subr.mxu0 0.0
      %355 = vmatpush1.msra.mxu0 0.0
      %356 = vmatprep.subr.mxu0 0.0
      %357 = vmatpush1.msra.mxu0 0.0
      %358 = vmatprep.subr.mxu0 0.0
      %359 = vmatpush1.msra.mxu0 0.0
      %360 = vmatprep.subr.mxu0 0.0
      %361 = vmatpush1.msra.mxu0 0.0
      %362 = vmatprep.subr.mxu0 0.0
      %363 = vmatpush1.msra.mxu0 0.0
      %364 = vmatprep.subr.mxu0 0.0
      %365 = vmatpush1.msra.mxu0 0.0
      %366 = vmatprep.subr.mxu0 0.0
      %367 = vmatpush1.msra.mxu0 0.0
      %368 = vmatprep.subr.mxu0 0.0
      %369 = vmatpush1.msra.mxu0 0.0
      %370 = vmatprep.subr.mxu0 0.0
      %371 = vmatpush1.msra.mxu0 0.0
      %372 = vmatprep.subr.mxu0 0.0
      %373 = vmatpush1.msra.mxu0 0.0
      %374 = vmatprep.subr.mxu0 0.0
      %375 = vmatpush1.msra.mxu0 0.0
      %376 = vmatprep.subr.mxu0 0.0
      %377 = vmatpush1.msra.mxu0 %v344
      %378 = vmatprep.subr.mxu0 0.0
      %379 = vmatpush2.msra.mxu0 0.0
      %380 = vmatprep.subr.mxu0 0.0
      %381 = vmatpush2.msra.mxu0 0.0
      %382 = vmatprep.subr.mxu0 0.0
      %383 = vmatpush2.msra.mxu0 0.0
      %384 = vmatprep.subr.mxu0 0.0
      %385 = vmatpush2.msra.mxu0 0.0
      %386 = vmatprep.subr.mxu0 0.0
      %387 = vmatpush2.msra.mxu0 0.0
      %388 = vmatprep.subr.mxu0 0.0
      %389 = vmatpush2.msra.mxu0 0.0
      %390 = vmatprep.subr.mxu0 0.0
      %391 = vmatpush2.msra.mxu0 0.0
      %392 = vmatprep.subr.mxu0 0.0
      %393 = vmatpush2.msra.mxu0 0.0
      %394 = vmatprep.subr.mxu0 0.0
      %395 = vmatpush2.msra.mxu0 0.0
      %396 = vmatprep.subr.mxu0 0.0
      %397 = vmatpush2.msra.mxu0 0.0
      %398 = vmatprep.subr.mxu0 0.0
      %399 = vmatpush2.msra.mxu0 0.0
      %400 = vmatprep.subr.mxu0 0.0
      %401 = vmatpush2.msra.mxu0 0.0
      %402 = vmatprep.subr.mxu0 0.0
      %403 = vmatpush2.msra.mxu0 0.0
      %404 = vmatprep.subr.mxu0 0.0
      %405 = vmatpush2.msra.mxu0 0.0
      %406 = vmatprep.subr.mxu0 0.0
      %407 = vmatpush2.msra.mxu0 0.0
      %408 = vmatprep.subr.mxu0 0.0
      %409 = vmatpush2.msra.mxu0 0.0
      %410 = vmatprep.mubr.f32.mxu0 0.0
      %411 = vmatmul.mubr.f32.gmra.mxu0 %v340
      %v412 = vpop.f32.mrf.mxu0
      %v413 = vadd.f32 0.0, %v412
      %v414 = vpop.f32.mrf.mxu0
      %415 = vdwg.mxu0
      %vm416 = vcmask 257024
      %v417 = vsel %vm416, %v329, 0.0
      %418 = vadd.xlane.f32.xlu0 %v417
      %v419 = vpop.xlane.xlu0 %418
      %v420 = vrcp.pop 32.0
      %v421 = vmul.f32 %v419, %v420
      %v422 = vsub.f32 %v329, %v421
      %v423 = vsel %vm416, %v413, 0.0
      %424 = vadd.xlane.f32.xlu0 %v423
      %v425 = vpop.xlane.xlu0 %424
      %v426 = vmul.f32 %v425, %v420
      %v427 = vsub.f32 %v413, %v426
      %v428 = vmul.f32 %v422, %v422
      %v429 = vsel %vm416, %v428, 0.0
      %430 = vadd.xlane.f32.xlu0 %v429
      %v431 = vpop.xlane.xlu0 %430
      %v432 = vrsqrt.pop %v431
      %v433 = vmul.f32 %v431, %v432
      %vm434 = vcmp.eq.f32.partialorder %v431, inf
      %v435 = vsel %vm434, %v431, %v433
      %vm436 = vcmp.eq.f32.partialorder %v431, 0.0
      %v437 = vand.u32 %v431, 2147483648
      %v438 = vsel %vm436, %v437, %v435
      %v439 = vmul.f32 %v427, %v427
      %v440 = vsel %vm416, %v439, 0.0
      %441 = vadd.xlane.f32.xlu0 %v440
      %v442 = vpop.xlane.xlu0 %441
      %v443 = vrsqrt.pop %v442
      %v444 = vmul.f32 %v442, %v443
      %vm445 = vcmp.eq.f32.partialorder %v442, inf
      %v446 = vsel %vm445, %v442, %v444
      %vm447 = vcmp.eq.f32.partialorder %v442, 0.0
      %v448 = vand.u32 %v442, 2147483648
      %v449 = vsel %vm447, %v448, %v446
      %v450 = vmax.f32 %v438, 1e-12
      %v451 = vrcp.pop %v450
      %v452 = vmul.f32 %v422, %v451
      %v453 = vmax.f32 %v449, 1e-12
      %v454 = vrcp.pop %v453
      %v455 = vmul.f32 %v427, %v454
      %v456 = vmul.f32 %v452, %v455
      %v457 = vsel %vm416, %v456, 0.0
      %458 = vadd.xlane.f32.xlu0 %v457
      %v459 = vpop.xlane.xlu0 %458
      %v460 = vsub.f32 1.0, %v459
      %vm461 = vcmask 1043456
      %v462 = vsel %vm461, %v460, 0.0
      %v463 = vrot.slane %v462, 4
      %v464 = vadd.f32 %v462, %v463
      %v465 = vrot.slane %v464, 2
      %v466 = vadd.f32 %v464, %v465
      %v467 = vrot.slane %v466, 1
      %v468 = vadd.f32 %v466, %v467
      %v469 = vrot.slane %v417, 4
      %v470 = vadd.f32 %v417, %v469
      %v471 = vrot.slane %v470, 2
      %v472 = vadd.f32 %v470, %v471
      %v473 = vrot.slane %v472, 1
      %v474 = vadd.f32 %v472, %v473
      %v475 = vrcp.pop 4.0
      %v476 = vmul.f32 %v474, %v475
      %v477 = vsub.f32 %v329, %v476
      %v478 = vmul.f32 %v477, %v477
      %v479 = vsel %vm416, %v478, 0.0
      %v480 = vrot.slane %v479, 4
      %v481 = vadd.f32 %v479, %v480
      %v482 = vrot.slane %v481, 2
      %v483 = vadd.f32 %v481, %v482
      %v484 = vrot.slane %v483, 1
      %v485 = vadd.f32 %v483, %v484
      %vm486 = vcmask 261120
      %v487 = vsel %vm486, %v485, 0.0
      %488 = vadd.xlane.f32.xlu0 %v487
      %v489 = vpop.xlane.xlu0 %488
      %v490 = vrcp.pop 3.0
      %v491 = vmul.f32 %v489, %v490
      %v492 = vmul.f32 %v468, %v475
      %v493 = vrcp.pop 24.0
      %v494 = vmul.f32 %v468, %v493
      %v495 = vmul.f32 %v492, 0.1
      %v496 = vrcp.pop %v491
      %v497 = vmul.f32 %v495, %v496
      %v498 = vmul.f32 %v494, 0.9
      %v499 = vadd.f32 %v497, %v498
      %vm500 = vcmask 0
      %501 = vst.msk [vmem:[#allocation6] sm:$0x1] %vm500, %v499
    $region29: #{tpu_custom_call.1} parent=1 // pred_fallthru
      _
    // Predicated region
    $region30: #{tpu_custom_call.1} parent=1 // pred_check
      _
    $region31: #{tpu_custom_call.1} parent=1 // pred_check_branch
      %503 = sbr.rel (0) target = $region33
    $region32: #{tpu_custom_call.1} parent=1 // pred_region
      %s505 = ssub.s32 16, 16
      %506 = vsyncadd [#allocation5], %s505
      %s508 = sshll.u32 [#allocation6], 4
      %s509 = int_to_ptr.vmem [resolvable:$true] %s508
      %511 = dma.vmem_to_hbm [thread:$0]  %s509, 16, %s3, [#allocation5]
    $region33: #{tpu_custom_call.1} parent=1 // pred_fallthru
      _
    // Predicated region
    $region34: #{tpu_custom_call.1} parent=1 // pred_check
      _
    $region35: #{tpu_custom_call.1} parent=1 // pred_check_branch
      %513 = sbr.rel (0) target = $region37
    $region36: #{tpu_custom_call.1} parent=1 // pred_region
      %514 = dma.done [#allocation5], 16
    $region37: #{tpu_custom_call.1} parent=1 // pred_fallthru
      _
    %515 = vsyncpa [#allocation4], 1
    %516 = vsyncpa [#allocation5], 1

</llo_original>
